<compile_context>
chip_gen: v7x
topology: tpu7x:2x2x1
jax: 0.10.0
libtpu: 0.0.40
codegen_flags: <defaults>
</compile_context>

<pallas_src>
import functools
from typing import NamedTuple, Optional

import jax
import jax.numpy as jnp
from jax.experimental import pallas as pl
from jax.experimental.pallas import tpu as pltpu

# bprws_consts stand-ins (deterministic, synthetic)
WITH_SI = False
RS_WD_I = 0.01
RS_WD_U = 0.01

# VMEM accounting (default plan, D=32 -> PACK=4, rows_per_tile=4096 i.e.
# 16384 examples/tile):
#   inputs : 3 streams x 2 buffers x (4096 x 128) x 4 B (f32) = 12 MiB
#            (6 MiB with the default bf16 tables)
#   output : (4096 x 8) f32 block, minor dim padded to 128 lanes in VMEM
#            -> 2 MiB x 2 buffers = 4 MiB
#   total  : <= 16 MiB, comfortably inside the 32 MiB default scoped VMEM
#            limit on v5e/v6e/v7x, with headroom.  With bf16 tables,
#            tile_examples=32768 is a reasonable v7x setting (per-step
#            pipeline overhead ~0.35 us vs ~1 us of DMA at 3.2 TB/s).
_DEFAULT_TILE_EXAMPLES = 16384
_ROW_ALIGN = 16   # keeps bf16 (16, 128) native sublane tiles whole


def _round_up(x, m):
    return ((x + m - 1) // m) * m


def _cdiv(a, b):
    return -(-a // b)


class _Plan(NamedTuple):
    pack: int            # examples packed per 128-lane row (4 for D=32)
    lane_width: int      # pack * dim (128 when D divides 128)
    rows_per_tile: int   # packed rows per grid step
    rows_padded: int     # total packed rows after padding

    @property
    def padded_batch(self):
        return self.rows_padded * self.pack

    @property
    def grid(self):
        return self.rows_padded // self.rows_per_tile


def _plan(batch, dim, tile_examples=None):
    """Pick packing + tiling for a batch of `batch` examples with factor dim `dim`."""
    tile_examples = tile_examples or _DEFAULT_TILE_EXAMPLES
    # Pack 128 // dim examples per lane row when dim divides 128 (free row-major
    # reshape); otherwise fall back to one example per row (lane-padded).
    pack = 128 // dim if (dim <= 128 and 128 % dim == 0) else 1
    lane_width = pack * dim
    rows = _cdiv(batch, pack)

    target = max(_ROW_ALIGN, _round_up(_cdiv(tile_examples, pack), _ROW_ALIGN))
    if rows > _ROW_ALIGN:
        # Guarantee >= 2 grid steps: enables DMA/compute software pipelining and
        # lets dimension_semantics=("parallel",) use both TensorCores on v7x.
        target = min(target, _round_up(_cdiv(rows, 2), _ROW_ALIGN))
    rows_per_tile = min(target, _round_up(rows, _ROW_ALIGN))
    rows_padded = _round_up(rows, rows_per_tile)
    return _Plan(pack, lane_width, rows_per_tile, rows_padded)


def _bpr_packed_kernel(u_ref, p_ref, n_ref, out_ref, *, dim, pack):
    """Per-tile packed BPR partials.

    Inputs are (rows, pack*dim) tiles holding `pack` examples per lane row.
    Writes out[:, 0:pack]      = z   (x_ui - x_uj per example)
           out[:, pack:2*pack] = reg (weighted L2 term per example)
    """
    u = u_ref[...].astype(jnp.float32)   # (rows, lw)
    p = p_ref[...].astype(jnp.float32)
    n = n_ref[...].astype(jnp.float32)

    # Elementwise work is fully 128-lane dense.
    ud = u * (p - n)                                        # -> sum = x_ui - x_uj
    reg = RS_WD_I * (p * p + n * n) + RS_WD_U * (u * u)     # -> sum = L2 reg term

    # Block-diagonal 0/1 selector: sel[l, e] = 1  iff  e*dim <= l < (e+1)*dim.
    # The segmented (per-example) reduce runs on the otherwise-idle MXU instead
    # of wide cross-lane XLU reduces.  precision=HIGHEST keeps it f32-exact.
    lw = dim * pack
    lane = jax.lax.broadcasted_iota(jnp.int32, (lw, pack), 0)
    seg = jax.lax.broadcasted_iota(jnp.int32, (lw, pack), 1)
    lo = seg * dim
    sel = jnp.where((lane >= lo) & (lane < lo + dim), 1.0, 0.0).astype(jnp.float32)

    z = jnp.dot(ud, sel, preferred_element_type=jnp.float32,
                precision=jax.lax.Precision.HIGHEST)        # (rows, pack)
    r = jnp.dot(reg, sel, preferred_element_type=jnp.float32,
                precision=jax.lax.Precision.HIGHEST)        # (rows, pack)

    out_ref[:, 0:pack] = z
    out_ref[:, pack:2 * pack] = r


def _input_spec(rows_per_tile, lane_width, buffers):
    if buffers is None:
        return pl.BlockSpec((rows_per_tile, lane_width), lambda i: (i, 0))
    # v5e knob: if xprof shows exposed DMA, sweep buffers=3 on the inputs.
    return pl.BlockSpec((rows_per_tile, lane_width), lambda i: (i, 0),
                        pipeline_mode=pl.Buffered(buffers))


def bpr_forward_pallas(u_factors, pos_vectors, neg_vectors, *, valid_batch=None,
                       tile_examples=None, plan: Optional[_Plan] = None,
                       input_buffers=None):
    """BPR hot path (scores + L2 sums) as one pipelined, lane-packed Pallas kernel.

    Returns (loss, bpr_no_l2), each float32 of shape (valid_batch,).
    """
    b_in, dim = u_factors.shape
    assert pos_vectors.shape == (b_in, dim) and neg_vectors.shape == (b_in, dim)
    valid = b_in if valid_batch is None else valid_batch

    if plan is None:
        plan = _plan(b_in, dim, tile_examples)
    b_pad = plan.padded_batch

    if b_in != b_pad:
        # Fallback only: callers should pad the int32 *index* vectors before the
        # gather (see RSModelJax.forward) so this extra HBM round trip is skipped.
        pad = ((0, b_pad - b_in), (0, 0))
        u_factors = jnp.pad(u_factors, pad)
        pos_vectors = jnp.pad(pos_vectors, pad)
        neg_vectors = jnp.pad(neg_vectors, pad)

    # Free row-major view: (b_pad, dim) -> (rows_padded, pack*dim).
    u_p = u_factors.reshape(plan.rows_padded, plan.lane_width)
    p_p = pos_vectors.reshape(plan.rows_padded, plan.lane_width)
    n_p = neg_vectors.reshape(plan.rows_padded, plan.lane_width)

    kernel = functools.partial(_bpr_packed_kernel, dim=dim, pack=plan.pack)
    out = pl.pallas_call(
        kernel,
        out_shape=jax.ShapeDtypeStruct((plan.rows_padded, 2 * plan.pack), jnp.float32),
        grid=(plan.grid,),
        in_specs=[
            _input_spec(plan.rows_per_tile, plan.lane_width, input_buffers),
            _input_spec(plan.rows_per_tile, plan.lane_width, input_buffers),
            _input_spec(plan.rows_per_tile, plan.lane_width, input_buffers),
        ],
        out_specs=pl.BlockSpec((plan.rows_per_tile, 2 * plan.pack), lambda i: (i, 0)),
        compiler_params=pltpu.CompilerParams(
            # Tiles are independent -> shard across both TensorCores on v7x;
            # neutral on single-TC v5e/v6e.
            dimension_semantics=("parallel",),
        ),
    )(u_p, p_p, n_p)

    # Row-major flatten restores example order (example index = row*pack + seg).
    z = out[:, :plan.pack].reshape(b_pad)[:valid]
    reg = out[:, plan.pack:].reshape(b_pad)[:valid]

    # Tiny dense finalization (~16 B/example) left to XLA on purpose; see header.
    bpr = -jax.nn.log_sigmoid(z)
    loss = bpr + reg
    return loss, bpr


class RSModelJax:
    """JAX/Pallas port of RSModel (with_si = False)."""

    def __init__(self, n_users, n_items, dim, key, factors_dtype=jnp.bfloat16):
        self.n_users = n_users
        self.n_items = n_items
        self.dim = dim
        ku, ki = jax.random.split(key)
        # nn.init.xavier_normal_: std = sqrt(2 / (fan_in + fan_out))
        std_u = (2.0 / (n_users + dim)) ** 0.5
        std_i = (2.0 / (n_items + dim)) ** 0.5
        # Default bf16 tables: halves HBM traffic for the bandwidth-bound hot
        # path; in-kernel math stays f32.  Relative error vs f32 tables is
        # ~1e-3 (intentional tradeoff).  Pass jnp.float32 for PyTorch parity.
        self.user_factors = (std_u * jax.random.normal(ku, (n_users, dim), jnp.float32)
                             ).astype(factors_dtype)
        self.item_factors = (std_i * jax.random.normal(ki, (n_items, dim), jnp.float32)
                             ).astype(factors_dtype)

    def forward(self, u_batch, i_batch_pos, i_batch_neg, tile_examples=None,
                input_buffers=None):
        batch = u_batch.shape[0]
        plan = _plan(batch, self.dim, tile_examples)
        b_pad = plan.padded_batch
        if b_pad != batch:
            # Pad the few-KB int32 index vectors, NOT the gathered (B, D)
            # matrices -> the gather emits already tile-aligned outputs.
            pad = (0, b_pad - batch)
            u_batch = jnp.pad(u_batch, pad)
            i_batch_pos = jnp.pad(i_batch_pos, pad)
            i_batch_neg = jnp.pad(i_batch_neg, pad)

        # Embedding gathers are glue (plain JAX indexing); fusing them into the
        # kernel is the remaining TODO(synk) noted in the header.
        u_factors = self.user_factors[u_batch]          # (b_pad, D)
        i_pos_vectors = self.item_factors[i_batch_pos]  # (b_pad, D)
        i_neg_vectors = self.item_factors[i_batch_neg]  # (b_pad, D)

        bpr_loss, bpr_loss_for_log_nol2 = bpr_forward_pallas(
            u_factors, i_pos_vectors, i_neg_vectors,
            valid_batch=batch, plan=plan, input_buffers=input_buffers)
        # torch .detach() -> stop_gradient
        bpr_loss_for_log_nol2 = jax.lax.stop_gradient(bpr_loss_for_log_nol2)
        bpr_mean_loss = bpr_loss.mean()
        return bpr_mean_loss, bpr_loss_for_log_nol2


def _reference_forward(model, u_batch, i_batch_pos, i_batch_neg):
    """Pure-JAX reference (f32 math on the model's own tables)."""
    u = model.user_factors[u_batch].astype(jnp.float32)
    p = model.item_factors[i_batch_pos].astype(jnp.float32)
    n = model.item_factors[i_batch_neg].astype(jnp.float32)
    x_ui = jnp.sum(u * p, axis=1)
    x_uj = jnp.sum(u * n, axis=1)
    bpr = -jax.nn.log_sigmoid(x_ui - x_uj)
    reg = (jnp.sum(p * p, 1) + jnp.sum(n * n, 1)) * RS_WD_I + jnp.sum(u * u, 1) * RS_WD_U
    return (bpr + reg).mean(), bpr


if __name__ == "__main__":
    key = jax.random.PRNGKey(0)
    k_model, k_u, k_p, k_n = jax.random.split(key, 4)

    n_users, n_items, dim, batch = 64, 64, 32, 8
    model = RSModelJax(n_users, n_items, dim, k_model)   # bf16 tables (default)

    u_batch = jax.random.randint(k_u, (batch,), 0, n_users)
    i_batch_pos = jax.random.randint(k_p, (batch,), 0, n_items)
    i_batch_neg = jax.random.randint(k_n, (batch,), 0, n_items)

    # 1) Small batch, single-tile path (PACK=4 lane packing, grid=1).
    mean_loss, nol2 = model.forward(u_batch, i_batch_pos, i_batch_neg)
    jax.block_until_ready((mean_loss, nol2))
    ref_mean, ref_nol2 = _reference_forward(model, u_batch, i_batch_pos, i_batch_neg)
    assert nol2.shape == (batch,)
    assert jnp.allclose(mean_loss, ref_mean, atol=1e-4, rtol=1e-4)
    assert jnp.allclose(nol2, ref_nol2, atol=1e-4, rtol=1e-4)

    # 2) Multi-tile path (grid=2) with a non-divisible batch -> exercises
    #    pipelining, megacore-friendly tiling, and index padding (300 -> 384).
    batch2 = 300
    k_u2, k_p2, k_n2 = jax.random.split(jax.random.PRNGKey(1), 3)
    u2 = jax.random.randint(k_u2, (batch2,), 0, n_users)
    p2 = jax.random.randint(k_p2, (batch2,), 0, n_items)
    n2 = jax.random.randint(k_n2, (batch2,), 0, n_items)
    mean2, nol2_2 = model.forward(u2, p2, n2, tile_examples=256)
    jax.block_until_ready((mean2, nol2_2))
    ref_mean2, ref_nol2_2 = _reference_forward(model, u2, p2, n2)
    assert nol2_2.shape == (batch2,)
    assert jnp.allclose(mean2, ref_mean2, atol=1e-4, rtol=1e-4)
    assert jnp.allclose(nol2_2, ref_nol2_2, atol=1e-4, rtol=1e-4)

    # 3) float32 tables (PyTorch-parity configuration), multi-tile path.
    model_f32 = RSModelJax(n_users, n_items, dim, k_model, factors_dtype=jnp.float32)
    mean3, nol2_3 = model_f32.forward(u2, p2, n2, tile_examples=256)
    jax.block_until_ready((mean3, nol2_3))
    ref_mean3, ref_nol2_3 = _reference_forward(model_f32, u2, p2, n2)
    assert jnp.allclose(mean3, ref_mean3, atol=1e-4, rtol=1e-4)
    assert jnp.allclose(nol2_3, ref_nol2_3, atol=1e-4, rtol=1e-4)

    print("KERNEL_OK")
</pallas_src>

<mosaic_0001>
module attributes {stable_mosaic.version = 11 : i64} {
  func.func @_bpr_packed_kernel(%arg0: i32, %arg1: memref<16x128xbf16, #tpu.memory_space<vmem>>, %arg2: memref<16x128xbf16, #tpu.memory_space<vmem>>, %arg3: memref<16x128xbf16, #tpu.memory_space<vmem>>, %arg4: memref<16x8xf32, #tpu.memory_space<vmem>>) attributes {dimension_semantics = [#tpu.dimension_semantics<parallel>], iteration_bounds = array<i64: 1>, scalar_prefetch = 0 : i64, scratch_operands = 0 : i64, tpu.core_type = #tpu.core_type<tc>, window_params = [{transform_indices = @transform_0, window_bounds = array<i64: 16, 128>}, {transform_indices = @transform_1, window_bounds = array<i64: 16, 128>}, {transform_indices = @transform_2, window_bounds = array<i64: 16, 128>}, {transform_indices = @transform_3, window_bounds = array<i64: 16, 8>}]} {
    %c0 = arith.constant 0 : index
    %c0_0 = arith.constant 0 : index
    %0 = vector.load %arg1[%c0, %c0_0] : memref<16x128xbf16, #tpu.memory_space<vmem>>, vector<16x128xbf16>
    %1 = arith.extf %0 : vector<16x128xbf16> to vector<16x128xf32>
    %c0_1 = arith.constant 0 : index
    %c0_2 = arith.constant 0 : index
    %2 = vector.load %arg2[%c0_1, %c0_2] : memref<16x128xbf16, #tpu.memory_space<vmem>>, vector<16x128xbf16>
    %3 = arith.extf %2 : vector<16x128xbf16> to vector<16x128xf32>
    %c0_3 = arith.constant 0 : index
    %c0_4 = arith.constant 0 : index
    %4 = vector.load %arg3[%c0_3, %c0_4] : memref<16x128xbf16, #tpu.memory_space<vmem>>, vector<16x128xbf16>
    %5 = arith.extf %4 : vector<16x128xbf16> to vector<16x128xf32>
    %6 = arith.subf %3, %5 : vector<16x128xf32>
    %7 = arith.mulf %1, %6 : vector<16x128xf32>
    %8 = arith.mulf %3, %3 : vector<16x128xf32>
    %9 = arith.mulf %5, %5 : vector<16x128xf32>
    %10 = arith.addf %8, %9 : vector<16x128xf32>
    %cst = arith.constant 0.00999999977 : f32
    %11 = vector.broadcast %cst : f32 to vector<16x128xf32>
    %12 = arith.mulf %11, %10 : vector<16x128xf32>
    %13 = arith.mulf %1, %1 : vector<16x128xf32>
    %cst_5 = arith.constant 0.00999999977 : f32
    %14 = vector.broadcast %cst_5 : f32 to vector<16x128xf32>
    %15 = arith.mulf %14, %13 : vector<16x128xf32>
    %16 = arith.addf %12, %15 : vector<16x128xf32>
    %17 = tpu.iota {dimensions = array<i32: 0>} : vector<128x4xi32>
    %18 = tpu.iota {dimensions = array<i32: 1>} : vector<128x4xi32>
    %c32_i32 = arith.constant 32 : i32
    %19 = vector.broadcast %c32_i32 : i32 to vector<128x4xi32>
    %20 = arith.muli %18, %19 : vector<128x4xi32>
    %21 = arith.cmpi sge, %17, %20 : vector<128x4xi32>
    %c32_i32_6 = arith.constant 32 : i32
    %22 = vector.broadcast %c32_i32_6 : i32 to vector<128x4xi32>
    %23 = arith.addi %20, %22 : vector<128x4xi32>
    %24 = arith.cmpi slt, %17, %23 : vector<128x4xi32>
    %25 = arith.andi %21, %24 : vector<128x4xi1>
    %cst_7 = arith.constant 1.000000e+00 : f32
    %cst_8 = arith.constant 0.000000e+00 : f32
    %26 = vector.broadcast %cst_7 : f32 to vector<128x4xf32>
    %27 = vector.broadcast %cst_8 : f32 to vector<128x4xf32>
    %28 = arith.select %25, %26, %27 : vector<128x4xi1>, vector<128x4xf32>
    %cst_9 = arith.constant dense<0.000000e+00> : vector<16x4xf32>
    %29 = tpu.matmul %7, %28, %cst_9 {dimension_numbers = #tpu.dot_dimension_numbers<[1], [0], [0], [1], [0, 0, 1, 1], [], []>, precision = #tpu.contract_precision<fp32>} : vector<16x128xf32>, vector<128x4xf32>, vector<16x4xf32> -> vector<16x4xf32>
    %cst_10 = arith.constant dense<0.000000e+00> : vector<16x4xf32>
    %30 = tpu.matmul %16, %28, %cst_10 {dimension_numbers = #tpu.dot_dimension_numbers<[1], [0], [0], [1], [0, 0, 1, 1], [], []>, precision = #tpu.contract_precision<fp32>} : vector<16x128xf32>, vector<128x4xf32>, vector<16x4xf32> -> vector<16x4xf32>
    %c0_11 = arith.constant 0 : index
    %c0_12 = arith.constant 0 : index
    %31 = vector.load %arg4[%c0_11, %c0_12] : memref<16x8xf32, #tpu.memory_space<vmem>>, vector<16x4xf32>
    tpu.vector_store %arg4[%c0_11, %c0_12], %29 {strides = array<i32>} : memref<16x8xf32, #tpu.memory_space<vmem>>, vector<16x4xf32>,
    %c0_13 = arith.constant 0 : index
    %c4 = arith.constant 4 : index
    %32 = vector.load %arg4[%c0_13, %c4] : memref<16x8xf32, #tpu.memory_space<vmem>>, vector<16x4xf32>
    tpu.vector_store %arg4[%c0_13, %c4], %30 {strides = array<i32>} : memref<16x8xf32, #tpu.memory_space<vmem>>, vector<16x4xf32>,
    return
  }
  func.func @transform_0(%arg0: i32) -> (i32, i32) {
    %c0_i32 = arith.constant 0 : i32
    %c0_i32_0 = arith.constant 0 : i32
    return %arg0, %c0_i32 : i32, i32
  }
  func.func @transform_1(%arg0: i32) -> (i32, i32) {
    %c0_i32 = arith.constant 0 : i32
    %c0_i32_0 = arith.constant 0 : i32
    return %arg0, %c0_i32 : i32, i32
  }
  func.func @transform_2(%arg0: i32) -> (i32, i32) {
    %c0_i32 = arith.constant 0 : i32
    %c0_i32_0 = arith.constant 0 : i32
    return %arg0, %c0_i32 : i32, i32
  }
  func.func @transform_3(%arg0: i32) -> (i32, i32) {
    %c0_i32 = arith.constant 0 : i32
    %c0_i32_0 = arith.constant 0 : i32
    return %arg0, %c0_i32 : i32, i32
  }
}

</mosaic_0001>

<llo_original>
// kernel: tpu_custom_call.1
$region0: #{tpu_custom_call.1}
  #allocation0 [shape = 'u32[]', space=smem, size = 0x4, offset = 0x4, fixed_abs, tag = 'smem constant byte address 0x4 - core index']
  #allocation1 [shape = 'u32[144,128]{1,0:T(1,128)}', space=vmem, size = 0x12000, scoped, tag = 'internal scratch']
  %s0 = inlined_call_operand.hbm [shape: bf16[16,128], index: 0, kind: input, shape index: {}]
  %s1 = inlined_call_operand.hbm [shape: bf16[16,128], index: 1, kind: input, shape index: {}]
  %s2 = inlined_call_operand.hbm [shape: bf16[16,128], index: 2, kind: input, shape index: {}]
  %s3 = inlined_call_operand.vmem [shape: f32[16,8], index: 3, kind: output, shape index: {}]
  %s4 = sld [smem:[#allocation0]]
  $region34: #{tpu_custom_call.1} parent=0
    _
  %s6 = ssub.s32 1, %s4
  %s7 = scalar_select 0, %s6, %s4
  $region1: #{tpu_custom_call.1} parent=0
    #allocation2 [shape = 'u8[4096]{0}', space=vmem, size = 0x1000, scoped, tag = 'input window, operand 0, single buffered']
    #allocation3 [shape = 's32[1]{0}', space=sflag, size = 0x4, scoped, tag = 'scoped memory for tpu_custom_call.1']
    #allocation4 [shape = 'u8[4096]{0}', space=vmem, size = 0x1000, scoped, tag = 'input window, operand 1, single buffered']
    #allocation5 [shape = 's32[1]{0}', space=sflag, size = 0x4, scoped, tag = 'scoped memory for tpu_custom_call.1']
    #allocation6 [shape = 'u8[4096]{0}', space=vmem, size = 0x1000, scoped, tag = 'input window, operand 2, single buffered']
    %8 = vsyncpa [#allocation3], 0
    %9 = vsyncpa [#allocation5], 0
    // Predicated region
    $region2: #{tpu_custom_call.1} parent=1 // pred_check
      _
    $region3: #{tpu_custom_call.1} parent=1 // pred_check_branch
      %11 = sbr.rel (0) target = $region5
    $region4: #{tpu_custom_call.1} parent=1 // pred_region
      %s13 = ssub.s32 128, 128
      %14 = vsyncadd [#allocation3], %s13
      %s15 = sshll.u32 [#allocation2], 4
      %s16 = int_to_ptr.vmem [resolvable:$true] %s15
      %21 = dma.hbm_to_vmem [thread:$0]  %s0, 128, %s16, [#allocation3], 64, 64, 4
    $region5: #{tpu_custom_call.1} parent=1 // pred_fallthru
      _
    // Predicated region
    $region6: #{tpu_custom_call.1} parent=1 // pred_check
      _
    $region7: #{tpu_custom_call.1} parent=1 // pred_check_branch
      %23 = sbr.rel (0) target = $region9
    $region8: #{tpu_custom_call.1} parent=1 // pred_region
      %s25 = ssub.s32 128, 128
      %26 = vsyncadd [#allocation5], %s25
      %s27 = sshll.u32 [#allocation4], 4
      %s28 = int_to_ptr.vmem [resolvable:$true] %s27
      %33 = dma.hbm_to_vmem [thread:$0]  %s1, 128, %s28, [#allocation5], 64, 64, 4
    $region9: #{tpu_custom_call.1} parent=1 // pred_fallthru
      _
    // Predicated region
    $region10: #{tpu_custom_call.1} parent=1 // pred_check
      _
    $region11: #{tpu_custom_call.1} parent=1 // pred_check_branch
      %35 = sbr.rel (0) target = $region13
    $region12: #{tpu_custom_call.1} parent=1 // pred_region
      %s37 = ssub.s32 128, 128
      %38 = vsyncadd [#allocation5], %s37
      %s39 = sshll.u32 [#allocation6], 4
      %s40 = int_to_ptr.vmem [resolvable:$true] %s39
      %45 = dma.hbm_to_vmem [thread:$0]  %s2, 128, %s40, [#allocation5], 64, 64, 4
    $region13: #{tpu_custom_call.1} parent=1 // pred_fallthru
      _
    // Predicated region
    $region14: #{tpu_custom_call.1} parent=1 // pred_check
      _
    $region15: #{tpu_custom_call.1} parent=1 // pred_check_branch
      %47 = sbr.rel (0) target = $region17
    $region16: #{tpu_custom_call.1} parent=1 // pred_region
      %48 = dma.done [#allocation3], 128
    $region17: #{tpu_custom_call.1} parent=1 // pred_fallthru
      _
    // Predicated region
    $region18: #{tpu_custom_call.1} parent=1 // pred_check
      _
    $region19: #{tpu_custom_call.1} parent=1 // pred_check_branch
      %50 = sbr.rel (0) target = $region21
    $region20: #{tpu_custom_call.1} parent=1 // pred_region
      %51 = dma.done [#allocation5], 128
    $region21: #{tpu_custom_call.1} parent=1 // pred_fallthru
      _
    // Predicated region
    $region22: #{tpu_custom_call.1} parent=1 // pred_check
      _
    $region23: #{tpu_custom_call.1} parent=1 // pred_check_branch
      %53 = sbr.rel (0) target = $region25
    $region24: #{tpu_custom_call.1} parent=1 // pred_region
      %54 = dma.done [#allocation5], 128
    $region25: #{tpu_custom_call.1} parent=1 // pred_fallthru
      _
    %v55 = vld [vmem:[#allocation2] sm:$0xf]
    %v56 = vld [vmem:[#allocation2 + $0x4] sm:$0xf]
    %v57 = vunpack.c.l.bf16 %v55
    %v58 = vunpack.c.l.bf16 %v56
    %v59 = vld [vmem:[#allocation4] sm:$0xf]
    %v60 = vld [vmem:[#allocation4 + $0x4] sm:$0xf]
    %v61 = vunpack.c.l.bf16 %v59
    %v62 = vunpack.c.l.bf16 %v60
    %v63 = vld [vmem:[#allocation6] sm:$0xf]
    %v64 = vld [vmem:[#allocation6 + $0x4] sm:$0xf]
    %v65 = vunpack.c.l.bf16 %v63
    %v66 = vunpack.c.l.bf16 %v64
    %v67 = vsub.f32 %v61, %v65
    %v68 = vsub.f32 %v62, %v66
    %v69 = vmul.f32 %v57, %v67
    %v70 = vmul.f32 %v58, %v68
    %v71 = vmul.f32 %v61, %v61
    %v72 = vmul.f32 %v62, %v62
    %v73 = vmul.f32 %v65, %v65
    %v74 = vmul.f32 %v66, %v66
    %v75 = vadd.f32 %v71, %v73
    %v76 = vadd.f32 %v72, %v74
    %v77 = vmul.f32 %v75, 0.01
    %v78 = vmul.f32 %v76, 0.01
    %v79 = vmul.f32 %v57, %v57
    %v80 = vmul.f32 %v58, %v58
    %v81 = vmul.f32 %v79, 0.01
    %v82 = vmul.f32 %v80, 0.01
    %v83 = vadd.f32 %v77, %v81
    %v84 = vadd.f32 %v78, %v82
    %v85 = vlaneseq
    %v86 = vshrl.u32 %v85, 7
    %v87 = vadd.s32 %v86, 8
    %v88 = vadd.s32 %v86, 16
    %v89 = vadd.s32 %v86, 24
    %v90 = vadd.s32 %v86, 32
    %v91 = vadd.s32 %v86, 40
    %v92 = vadd.s32 %v86, 48
    %v93 = vadd.s32 %v86, 56
    %v94 = vadd.s32 %v86, 64
    %v95 = vadd.s32 %v86, 72
    %v96 = vadd.s32 %v86, 80
    %v97 = vadd.s32 %v86, 88
    %v98 = vadd.s32 %v86, 96
    %v99 = vadd.s32 %v86, 104
    %v100 = vadd.s32 %v86, 112
    %v101 = vadd.s32 %v86, 120
    %v102 = vlaneseq
    %v103 = vand.u32 %v102, 127
    %v104 = vmul.u32 %v103, 32
    %vm105 = vcmp.ge.s32.totalorder %v86, %v104
    %vm106 = vcmp.ge.s32.totalorder %v87, %v104
    %vm107 = vcmp.ge.s32.totalorder %v88, %v104
    %vm108 = vcmp.ge.s32.totalorder %v89, %v104
    %vm109 = vcmp.ge.s32.totalorder %v90, %v104
    %vm110 = vcmp.ge.s32.totalorder %v91, %v104
    %vm111 = vcmp.ge.s32.totalorder %v92, %v104
    %vm112 = vcmp.ge.s32.totalorder %v93, %v104
    %vm113 = vcmp.ge.s32.totalorder %v94, %v104
    %vm114 = vcmp.ge.s32.totalorder %v95, %v104
    %vm115 = vcmp.ge.s32.totalorder %v96, %v104
    %vm116 = vcmp.ge.s32.totalorder %v97, %v104
    %vm117 = vcmp.ge.s32.totalorder %v98, %v104
    %vm118 = vcmp.ge.s32.totalorder %v99, %v104
    %vm119 = vcmp.ge.s32.totalorder %v100, %v104
    %vm120 = vcmp.ge.s32.totalorder %v101, %v104
    %v121 = vadd.s32 %v104, 32
    %vm122 = vcmp.lt.s32.totalorder %v86, %v121
    %vm123 = vcmp.lt.s32.totalorder %v87, %v121
    %vm124 = vcmp.lt.s32.totalorder %v88, %v121
    %vm125 = vcmp.lt.s32.totalorder %v89, %v121
    %vm126 = vcmp.lt.s32.totalorder %v90, %v121
    %vm127 = vcmp.lt.s32.totalorder %v91, %v121
    %vm128 = vcmp.lt.s32.totalorder %v92, %v121
    %vm129 = vcmp.lt.s32.totalorder %v93, %v121
    %vm130 = vcmp.lt.s32.totalorder %v94, %v121
    %vm131 = vcmp.lt.s32.totalorder %v95, %v121
    %vm132 = vcmp.lt.s32.totalorder %v96, %v121
    %vm133 = vcmp.lt.s32.totalorder %v97, %v121
    %vm134 = vcmp.lt.s32.totalorder %v98, %v121
    %vm135 = vcmp.lt.s32.totalorder %v99, %v121
    %vm136 = vcmp.lt.s32.totalorder %v100, %v121
    %vm137 = vcmp.lt.s32.totalorder %v101, %v121
    %vm138 = vmand %vm105, %vm122
    %vm139 = vmand %vm106, %vm123
    %vm140 = vmand %vm107, %vm124
    %vm141 = vmand %vm108, %vm125
    %vm142 = vmand %vm109, %vm126
    %vm143 = vmand %vm110, %vm127
    %vm144 = vmand %vm111, %vm128
    %vm145 = vmand %vm112, %vm129
    %vm146 = vmand %vm113, %vm130
    %vm147 = vmand %vm114, %vm131
    %vm148 = vmand %vm115, %vm132
    %vm149 = vmand %vm116, %vm133
    %vm150 = vmand %vm117, %vm134
    %vm151 = vmand %vm118, %vm135
    %vm152 = vmand %vm119, %vm136
    %vm153 = vmand %vm120, %vm137
    %v154 = vsel %vm138, 1.0, 0.0
    %v155 = vsel %vm139, 1.0, 0.0
    %v156 = vsel %vm140, 1.0, 0.0
    %v157 = vsel %vm141, 1.0, 0.0
    %v158 = vsel %vm142, 1.0, 0.0
    %v159 = vsel %vm143, 1.0, 0.0
    %v160 = vsel %vm144, 1.0, 0.0
    %v161 = vsel %vm145, 1.0, 0.0
    %v162 = vsel %vm146, 1.0, 0.0
    %v163 = vsel %vm147, 1.0, 0.0
    %v164 = vsel %vm148, 1.0, 0.0
    %v165 = vsel %vm149, 1.0, 0.0
    %v166 = vsel %vm150, 1.0, 0.0
    %v167 = vsel %vm151, 1.0, 0.0
    %v168 = vsel %vm152, 1.0, 0.0
    %v169 = vsel %vm153, 1.0, 0.0
    %170 = vmatprep.subr.mxu0 0.0
    %171 = vmatpush1.msra.mxu0 %v154
    %172 = vmatprep.subr.mxu0 0.0
    %173 = vmatpush1.msra.mxu0 %v155
    %174 = vmatprep.subr.mxu0 0.0
    %175 = vmatpush1.msra.mxu0 %v156
    %176 = vmatprep.subr.mxu0 0.0
    %177 = vmatpush1.msra.mxu0 %v157
    %178 = vmatprep.subr.mxu0 0.0
    %179 = vmatpush1.msra.mxu0 %v158
    %180 = vmatprep.subr.mxu0 0.0
    %181 = vmatpush1.msra.mxu0 %v159
    %182 = vmatprep.subr.mxu0 0.0
    %183 = vmatpush1.msra.mxu0 %v160
    %184 = vmatprep.subr.mxu0 0.0
    %185 = vmatpush1.msra.mxu0 %v161
    %186 = vmatprep.subr.mxu0 0.0
    %187 = vmatpush1.msra.mxu0 %v162
    %188 = vmatprep.subr.mxu0 0.0
    %189 = vmatpush1.msra.mxu0 %v163
    %190 = vmatprep.subr.mxu0 0.0
    %191 = vmatpush1.msra.mxu0 %v164
    %192 = vmatprep.subr.mxu0 0.0
    %193 = vmatpush1.msra.mxu0 %v165
    %194 = vmatprep.subr.mxu0 0.0
    %195 = vmatpush1.msra.mxu0 %v166
    %196 = vmatprep.subr.mxu0 0.0
    %197 = vmatpush1.msra.mxu0 %v167
    %198 = vmatprep.subr.mxu0 0.0
    %199 = vmatpush1.msra.mxu0 %v168
    %200 = vmatprep.subr.mxu0 0.0
    %201 = vmatpush1.msra.mxu0 %v169
    %202 = vmatprep.subr.mxu0 0.0
    %203 = vmatpush1.msra.mxu0 0.0
    %204 = vmatprep.subr.mxu0 0.0
    %205 = vmatpush1.msra.mxu0 0.0
    %206 = vmatprep.subr.mxu0 0.0
    %207 = vmatpush1.msra.mxu0 0.0
    %208 = vmatprep.subr.mxu0 0.0
    %209 = vmatpush1.msra.mxu0 0.0
    %210 = vmatprep.subr.mxu0 0.0
    %211 = vmatpush1.msra.mxu0 0.0
    %212 = vmatprep.subr.mxu0 0.0
    %213 = vmatpush1.msra.mxu0 0.0
    %214 = vmatprep.subr.mxu0 0.0
    %215 = vmatpush1.msra.mxu0 0.0
    %216 = vmatprep.subr.mxu0 0.0
    %217 = vmatpush1.msra.mxu0 0.0
    %218 = vmatprep.subr.mxu0 0.0
    %219 = vmatpush1.msra.mxu0 0.0
    %220 = vmatprep.subr.mxu0 0.0
    %221 = vmatpush1.msra.mxu0 0.0
    %222 = vmatprep.subr.mxu0 0.0
    %223 = vmatpush1.msra.mxu0 0.0
    %224 = vmatprep.subr.mxu0 0.0
    %225 = vmatpush1.msra.mxu0 0.0
    %226 = vmatprep.subr.mxu0 0.0
    %227 = vmatpush1.msra.mxu0 0.0
    %228 = vmatprep.subr.mxu0 0.0
    %229 = vmatpush1.msra.mxu0 0.0
    %230 = vmatprep.subr.mxu0 0.0
    %231 = vmatpush1.msra.mxu0 0.0
    %232 = vmatprep.subr.mxu0 0.0
    %233 = vmatpush1.msra.mxu0 0.0
    %234 = vmatprep.mubr.f32.mxu0 0.0
    %v235 = vand.u32 %v69, 4294901760
    %v236 = vsub.f32 %v69, %v235
    %v237 = vand.u32 %v236, 4294901760
    %v238 = vsub.f32 %v236, %v237
    %v239 = vand.u32 %v238, 4294901760
    %240 = vmatmul.mubr.f32.gmra.mrb[0].mxu0 %v239
    %v241 = vpop.f32.mrb[0].mxu0
    %v242 = vadd.f32 0.0, %v241
    %v243 = vpop.f32.mrb[0].mxu0
    %244 = vmatprep.mubr.f32.mxu0 0.0
    %v245 = vand.u32 %v70, 4294901760
    %v246 = vsub.f32 %v70, %v245
    %v247 = vand.u32 %v246, 4294901760
    %v248 = vsub.f32 %v246, %v247
    %v249 = vand.u32 %v248, 4294901760
    %250 = vmatmul.mubr.f32.gmra.mrb[0].mxu0 %v249
    %v251 = vpop.f32.mrb[0].mxu0
    %v252 = vadd.f32 0.0, %v251
    %v253 = vpop.f32.mrb[0].mxu0
    %254 = vdwg.mxu0
    %255 = vmatprep.subr.mxu0 0.0
    %v256 = vsub.f32 %v154, %v154
    %v257 = vand.u32 %v256, 4294901760
    %v258 = vsub.f32 %v256, %v257
    %v259 = vand.u32 %v258, 4294901760
    %260 = vmatpush1.msra.mxu0 %v259
    %261 = vmatprep.subr.mxu0 0.0
    %v262 = vsub.f32 %v155, %v155
    %v263 = vand.u32 %v262, 4294901760
    %v264 = vsub.f32 %v262, %v263
    %v265 = vand.u32 %v264, 4294901760
    %266 = vmatpush1.msra.mxu0 %v265
    %267 = vmatprep.subr.mxu0 0.0
    %v268 = vsub.f32 %v156, %v156
    %v269 = vand.u32 %v268, 4294901760
    %v270 = vsub.f32 %v268, %v269
    %v271 = vand.u32 %v270, 4294901760
    %272 = vmatpush1.msra.mxu0 %v271
    %273 = vmatprep.subr.mxu0 0.0
    %v274 = vsub.f32 %v157, %v157
    %v275 = vand.u32 %v274, 4294901760
    %v276 = vsub.f32 %v274, %v275
    %v277 = vand.u32 %v276, 4294901760
    %278 = vmatpush1.msra.mxu0 %v277
    %279 = vmatprep.subr.mxu0 0.0
    %v280 = vsub.f32 %v158, %v158
    %v281 = vand.u32 %v280, 4294901760
    %v282 = vsub.f32 %v280, %v281
    %v283 = vand.u32 %v282, 4294901760
    %284 = vmatpush1.msra.mxu0 %v283
    %285 = vmatprep.subr.mxu0 0.0
    %v286 = vsub.f32 %v159, %v159
    %v287 = vand.u32 %v286, 4294901760
    %v288 = vsub.f32 %v286, %v287
    %v289 = vand.u32 %v288, 4294901760
    %290 = vmatpush1.msra.mxu0 %v289
    %291 = vmatprep.subr.mxu0 0.0
    %v292 = vsub.f32 %v160, %v160
    %v293 = vand.u32 %v292, 4294901760
    %v294 = vsub.f32 %v292, %v293
    %v295 = vand.u32 %v294, 4294901760
    %296 = vmatpush1.msra.mxu0 %v295
    %297 = vmatprep.subr.mxu0 0.0
    %v298 = vsub.f32 %v161, %v161
    %v299 = vand.u32 %v298, 4294901760
    %v300 = vsub.f32 %v298, %v299
    %v301 = vand.u32 %v300, 4294901760
    %302 = vmatpush1.msra.mxu0 %v301
    %303 = vmatprep.subr.mxu0 0.0
    %v304 = vsub.f32 %v162, %v162
    %v305 = vand.u32 %v304, 4294901760
    %v306 = vsub.f32 %v304, %v305
    %v307 = vand.u32 %v306, 4294901760
    %308 = vmatpush1.msra.mxu0 %v307
    %309 = vmatprep.subr.mxu0 0.0
    %v310 = vsub.f32 %v163, %v163
    %v311 = vand.u32 %v310, 4294901760
    %v312 = vsub.f32 %v310, %v311
    %v313 = vand.u32 %v312, 4294901760
    %314 = vmatpush1.msra.mxu0 %v313
    %315 = vmatprep.subr.mxu0 0.0
    %v316 = vsub.f32 %v164, %v164
    %v317 = vand.u32 %v316, 4294901760
    %v318 = vsub.f32 %v316, %v317
    %v319 = vand.u32 %v318, 4294901760
    %320 = vmatpush1.msra.mxu0 %v319
    %321 = vmatprep.subr.mxu0 0.0
    %v322 = vsub.f32 %v165, %v165
    %v323 = vand.u32 %v322, 4294901760
    %v324 = vsub.f32 %v322, %v323
    %v325 = vand.u32 %v324, 4294901760
    %326 = vmatpush1.msra.mxu0 %v325
    %327 = vmatprep.subr.mxu0 0.0
    %v328 = vsub.f32 %v166, %v166
    %v329 = vand.u32 %v328, 4294901760
    %v330 = vsub.f32 %v328, %v329
    %v331 = vand.u32 %v330, 4294901760
    %332 = vmatpush1.msra.mxu0 %v331
    %333 = vmatprep.subr.mxu0 0.0
    %v334 = vsub.f32 %v167, %v167
    %v335 = vand.u32 %v334, 4294901760
    %v336 = vsub.f32 %v334, %v335
    %v337 = vand.u32 %v336, 4294901760
    %338 = vmatpush1.msra.mxu0 %v337
    %339 = vmatprep.subr.mxu0 0.0
    %v340 = vsub.f32 %v168, %v168
    %v341 = vand.u32 %v340, 4294901760
    %v342 = vsub.f32 %v340, %v341
    %v343 = vand.u32 %v342, 4294901760
    %344 = vmatpush1.msra.mxu0 %v343
    %345 = vmatprep.subr.mxu0 0.0
    %v346 = vsub.f32 %v169, %v169
    %v347 = vand.u32 %v346, 4294901760
    %v348 = vsub.f32 %v346, %v347
    %v349 = vand.u32 %v348, 4294901760
    %350 = vmatpush1.msra.mxu0 %v349
    %351 = vmatprep.subr.mxu0 0.0
    %352 = vmatpush1.msra.mxu0 0.0
    %353 = vmatprep.subr.mxu0 0.0
    %354 = vmatpush1.msra.mxu0 0.0
    %355 = vmatprep.subr.mxu0 0.0
    %356 = vmatpush1.msra.mxu0 0.0
    %357 = vmatprep.subr.mxu0 0.0
    %358 = vmatpush1.msra.mxu0 0.0
    %359 = vmatprep.subr.mxu0 0.0
    %360 = vmatpush1.msra.mxu0 0.0
    %361 = vmatprep.subr.mxu0 0.0
    %362 = vmatpush1.msra.mxu0 0.0
    %363 = vmatprep.subr.mxu0 0.0
    %364 = vmatpush1.msra.mxu0 0.0
    %365 = vmatprep.subr.mxu0 0.0
    %366 = vmatpush1.msra.mxu0 0.0
    %367 = vmatprep.subr.mxu0 0.0
    %368 = vmatpush1.msra.mxu0 0.0
    %369 = vmatprep.subr.mxu0 0.0
    %370 = vmatpush1.msra.mxu0 0.0
    %371 = vmatprep.subr.mxu0 0.0
    %372 = vmatpush1.msra.mxu0 0.0
    %373 = vmatprep.subr.mxu0 0.0
    %374 = vmatpush1.msra.mxu0 0.0
    %375 = vmatprep.subr.mxu0 0.0
    %376 = vmatpush1.msra.mxu0 0.0
    %377 = vmatprep.subr.mxu0 0.0
    %378 = vmatpush1.msra.mxu0 0.0
    %379 = vmatprep.subr.mxu0 0.0
    %380 = vmatpush1.msra.mxu0 0.0
    %381 = vmatprep.subr.mxu0 0.0
    %382 = vmatpush1.msra.mxu0 0.0
    %383 = vmatprep.mubr.f32.mxu0 0.0
    %v384 = vand.u32 %v69, 4294901760
    %385 = vmatmul.mubr.f32.gmra.mrb[0].mxu0 %v384
    %v386 = vpop.f32.mrb[0].mxu0
    %v387 = vadd.f32 %v242, %v386
    %v388 = vpop.f32.mrb[0].mxu0
    %389 = vmatprep.mubr.f32.mxu0 0.0
    %v390 = vand.u32 %v70, 4294901760
    %391 = vmatmul.mubr.f32.gmra.mrb[0].mxu0 %v390
    %v392 = vpop.f32.mrb[0].mxu0
    %v393 = vadd.f32 %v252, %v392
    %v394 = vpop.f32.mrb[0].mxu0
    %395 = vdwg.mxu0
    %396 = vmatprep.subr.mxu0 0.0
    %v397 = vsub.f32 %v154, %v154
    %398 = vmatpush1.msra.mxu0 %v397
    %399 = vmatprep.subr.mxu0 0.0
    %v400 = vsub.f32 %v155, %v155
    %401 = vmatpush1.msra.mxu0 %v400
    %402 = vmatprep.subr.mxu0 0.0
    %v403 = vsub.f32 %v156, %v156
    %404 = vmatpush1.msra.mxu0 %v403
    %405 = vmatprep.subr.mxu0 0.0
    %v406 = vsub.f32 %v157, %v157
    %407 = vmatpush1.msra.mxu0 %v406
    %408 = vmatprep.subr.mxu0 0.0
    %v409 = vsub.f32 %v158, %v158
    %410 = vmatpush1.msra.mxu0 %v409
    %411 = vmatprep.subr.mxu0 0.0
    %v412 = vsub.f32 %v159, %v159
    %413 = vmatpush1.msra.mxu0 %v412
    %414 = vmatprep.subr.mxu0 0.0
    %v415 = vsub.f32 %v160, %v160
    %416 = vmatpush1.msra.mxu0 %v415
    %417 = vmatprep.subr.mxu0 0.0
    %v418 = vsub.f32 %v161, %v161
    %419 = vmatpush1.msra.mxu0 %v418
    %420 = vmatprep.subr.mxu0 0.0
    %v421 = vsub.f32 %v162, %v162
    %422 = vmatpush1.msra.mxu0 %v421
    %423 = vmatprep.subr.mxu0 0.0
    %v424 = vsub.f32 %v163, %v163
    %425 = vmatpush1.msra.mxu0 %v424
    %426 = vmatprep.subr.mxu0 0.0
    %v427 = vsub.f32 %v164, %v164
    %428 = vmatpush1.msra.mxu0 %v427
    %429 = vmatprep.subr.mxu0 0.0
    %v430 = vsub.f32 %v165, %v165
    %431 = vmatpush1.msra.mxu0 %v430
    %432 = vmatprep.subr.mxu0 0.0
    %v433 = vsub.f32 %v166, %v166
    %434 = vmatpush1.msra.mxu0 %v433
    %435 = vmatprep.subr.mxu0 0.0
    %v436 = vsub.f32 %v167, %v167
    %437 = vmatpush1.msra.mxu0 %v436
    %438 = vmatprep.subr.mxu0 0.0
    %v439 = vsub.f32 %v168, %v168
    %440 = vmatpush1.msra.mxu0 %v439
    %441 = vmatprep.subr.mxu0 0.0
    %v442 = vsub.f32 %v169, %v169
    %443 = vmatpush1.msra.mxu0 %v442
    %444 = vmatprep.subr.mxu0 0.0
    %445 = vmatpush1.msra.mxu0 0.0
    %446 = vmatprep.subr.mxu0 0.0
    %447 = vmatpush1.msra.mxu0 0.0
    %448 = vmatprep.subr.mxu0 0.0
    %449 = vmatpush1.msra.mxu0 0.0
    %450 = vmatprep.subr.mxu0 0.0
    %451 = vmatpush1.msra.mxu0 0.0
    %452 = vmatprep.subr.mxu0 0.0
    %453 = vmatpush1.msra.mxu0 0.0
    %454 = vmatprep.subr.mxu0 0.0
    %455 = vmatpush1.msra.mxu0 0.0
    %456 = vmatprep.subr.mxu0 0.0
    %457 = vmatpush1.msra.mxu0 0.0
    %458 = vmatprep.subr.mxu0 0.0
    %459 = vmatpush1.msra.mxu0 0.0
    %460 = vmatprep.subr.mxu0 0.0
    %461 = vmatpush1.msra.mxu0 0.0
    %462 = vmatprep.subr.mxu0 0.0
    %463 = vmatpush1.msra.mxu0 0.0
    %464 = vmatprep.subr.mxu0 0.0
    %465 = vmatpush1.msra.mxu0 0.0
    %466 = vmatprep.subr.mxu0 0.0
    %467 = vmatpush1.msra.mxu0 0.0
    %468 = vmatprep.subr.mxu0 0.0
    %469 = vmatpush1.msra.mxu0 0.0
    %470 = vmatprep.subr.mxu0 0.0
    %471 = vmatpush1.msra.mxu0 0.0
    %472 = vmatprep.subr.mxu0 0.0
    %473 = vmatpush1.msra.mxu0 0.0
    %474 = vmatprep.subr.mxu0 0.0
    %475 = vmatpush1.msra.mxu0 0.0
    %476 = vmatprep.mubr.f32.mxu0 0.0
    %v477 = vand.u32 %v69, 4294901760
    %v478 = vsub.f32 %v69, %v477
    %479 = vmatmul.mubr.f32.gmra.mrb[0].mxu0 %v478
    %v480 = vpop.f32.mrb[0].mxu0
    %v481 = vadd.f32 %v387, %v480
    %v482 = vpop.f32.mrb[0].mxu0
    %483 = vmatprep.mubr.f32.mxu0 0.0
    %v484 = vand.u32 %v70, 4294901760
    %v485 = vsub.f32 %v70, %v484
    %486 = vmatmul.mubr.f32.gmra.mrb[0].mxu0 %v485
    %v487 = vpop.f32.mrb[0].mxu0
    %v488 = vadd.f32 %v393, %v487
    %v489 = vpop.f32.mrb[0].mxu0
    %490 = vdwg.mxu0
    %491 = vmatprep.subr.mxu0 0.0
    %492 = vmatpush1.msra.mxu0 %v154
    %493 = vmatprep.subr.mxu0 0.0
    %494 = vmatpush1.msra.mxu0 %v155
    %495 = vmatprep.subr.mxu0 0.0
    %496 = vmatpush1.msra.mxu0 %v156
    %497 = vmatprep.subr.mxu0 0.0
    %498 = vmatpush1.msra.mxu0 %v157
    %499 = vmatprep.subr.mxu0 0.0
    %500 = vmatpush1.msra.mxu0 %v158
    %501 = vmatprep.subr.mxu0 0.0
    %502 = vmatpush1.msra.mxu0 %v159
    %503 = vmatprep.subr.mxu0 0.0
    %504 = vmatpush1.msra.mxu0 %v160
    %505 = vmatprep.subr.mxu0 0.0
    %506 = vmatpush1.msra.mxu0 %v161
    %507 = vmatprep.subr.mxu0 0.0
    %508 = vmatpush1.msra.mxu0 %v162
    %509 = vmatprep.subr.mxu0 0.0
    %510 = vmatpush1.msra.mxu0 %v163
    %511 = vmatprep.subr.mxu0 0.0
    %512 = vmatpush1.msra.mxu0 %v164
    %513 = vmatprep.subr.mxu0 0.0
    %514 = vmatpush1.msra.mxu0 %v165
    %515 = vmatprep.subr.mxu0 0.0
    %516 = vmatpush1.msra.mxu0 %v166
    %517 = vmatprep.subr.mxu0 0.0
    %518 = vmatpush1.msra.mxu0 %v167
    %519 = vmatprep.subr.mxu0 0.0
    %520 = vmatpush1.msra.mxu0 %v168
    %521 = vmatprep.subr.mxu0 0.0
    %522 = vmatpush1.msra.mxu0 %v169
    %523 = vmatprep.subr.mxu0 0.0
    %524 = vmatpush1.msra.mxu0 0.0
    %525 = vmatprep.subr.mxu0 0.0
    %526 = vmatpush1.msra.mxu0 0.0
    %527 = vmatprep.subr.mxu0 0.0
    %528 = vmatpush1.msra.mxu0 0.0
    %529 = vmatprep.subr.mxu0 0.0
    %530 = vmatpush1.msra.mxu0 0.0
    %531 = vmatprep.subr.mxu0 0.0
    %532 = vmatpush1.msra.mxu0 0.0
    %533 = vmatprep.subr.mxu0 0.0
    %534 = vmatpush1.msra.mxu0 0.0
    %535 = vmatprep.subr.mxu0 0.0
    %536 = vmatpush1.msra.mxu0 0.0
    %537 = vmatprep.subr.mxu0 0.0
    %538 = vmatpush1.msra.mxu0 0.0
    %539 = vmatprep.subr.mxu0 0.0
    %540 = vmatpush1.msra.mxu0 0.0
    %541 = vmatprep.subr.mxu0 0.0
    %542 = vmatpush1.msra.mxu0 0.0
    %543 = vmatprep.subr.mxu0 0.0
    %544 = vmatpush1.msra.mxu0 0.0
    %545 = vmatprep.subr.mxu0 0.0
    %546 = vmatpush1.msra.mxu0 0.0
    %547 = vmatprep.subr.mxu0 0.0
    %548 = vmatpush1.msra.mxu0 0.0
    %549 = vmatprep.subr.mxu0 0.0
    %550 = vmatpush1.msra.mxu0 0.0
    %551 = vmatprep.subr.mxu0 0.0
    %552 = vmatpush1.msra.mxu0 0.0
    %553 = vmatprep.subr.mxu0 0.0
    %554 = vmatpush1.msra.mxu0 0.0
    %555 = vmatprep.mubr.f32.mxu0 0.0
    %v556 = vand.u32 %v69, 4294901760
    %v557 = vsub.f32 %v69, %v556
    %v558 = vand.u32 %v557, 4294901760
    %559 = vmatmul.mubr.f32.gmra.mrb[0].mxu0 %v558
    %v560 = vpop.f32.mrb[0].mxu0
    %v561 = vadd.f32 %v481, %v560
    %v562 = vpop.f32.mrb[0].mxu0
    %563 = vmatprep.mubr.f32.mxu0 0.0
    %v564 = vand.u32 %v70, 4294901760
    %v565 = vsub.f32 %v70, %v564
    %v566 = vand.u32 %v565, 4294901760
    %567 = vmatmul.mubr.f32.gmra.mrb[0].mxu0 %v566
    %v568 = vpop.f32.mrb[0].mxu0
    %v569 = vadd.f32 %v488, %v568
    %v570 = vpop.f32.mrb[0].mxu0
    %571 = vdwg.mxu0
    %572 = vmatprep.subr.mxu0 0.0
    %v573 = vsub.f32 %v154, %v154
    %v574 = vand.u32 %v573, 4294901760
    %575 = vmatpush1.msra.mxu0 %v574
    %576 = vmatprep.subr.mxu0 0.0
    %v577 = vsub.f32 %v155, %v155
    %v578 = vand.u32 %v577, 4294901760
    %579 = vmatpush1.msra.mxu0 %v578
    %580 = vmatprep.subr.mxu0 0.0
    %v581 = vsub.f32 %v156, %v156
    %v582 = vand.u32 %v581, 4294901760
    %583 = vmatpush1.msra.mxu0 %v582
    %584 = vmatprep.subr.mxu0 0.0
    %v585 = vsub.f32 %v157, %v157
    %v586 = vand.u32 %v585, 4294901760
    %587 = vmatpush1.msra.mxu0 %v586
    %588 = vmatprep.subr.mxu0 0.0
    %v589 = vsub.f32 %v158, %v158
    %v590 = vand.u32 %v589, 4294901760
    %591 = vmatpush1.msra.mxu0 %v590
    %592 = vmatprep.subr.mxu0 0.0
    %v593 = vsub.f32 %v159, %v159
    %v594 = vand.u32 %v593, 4294901760
    %595 = vmatpush1.msra.mxu0 %v594
    %596 = vmatprep.subr.mxu0 0.0
    %v597 = vsub.f32 %v160, %v160
    %v598 = vand.u32 %v597, 4294901760
    %599 = vmatpush1.msra.mxu0 %v598
    %600 = vmatprep.subr.mxu0 0.0
    %v601 = vsub.f32 %v161, %v161
    %v602 = vand.u32 %v601, 4294901760
    %603 = vmatpush1.msra.mxu0 %v602
    %604 = vmatprep.subr.mxu0 0.0
    %v605 = vsub.f32 %v162, %v162
    %v606 = vand.u32 %v605, 4294901760
    %607 = vmatpush1.msra.mxu0 %v606
    %608 = vmatprep.subr.mxu0 0.0
    %v609 = vsub.f32 %v163, %v163
    %v610 = vand.u32 %v609, 4294901760
    %611 = vmatpush1.msra.mxu0 %v610
    %612 = vmatprep.subr.mxu0 0.0
    %v613 = vsub.f32 %v164, %v164
    %v614 = vand.u32 %v613, 4294901760
    %615 = vmatpush1.msra.mxu0 %v614
    %616 = vmatprep.subr.mxu0 0.0
    %v617 = vsub.f32 %v165, %v165
    %v618 = vand.u32 %v617, 4294901760
    %619 = vmatpush1.msra.mxu0 %v618
    %620 = vmatprep.subr.mxu0 0.0
    %v621 = vsub.f32 %v166, %v166
    %v622 = vand.u32 %v621, 4294901760
    %623 = vmatpush1.msra.mxu0 %v622
    %624 = vmatprep.subr.mxu0 0.0
    %v625 = vsub.f32 %v167, %v167
    %v626 = vand.u32 %v625, 4294901760
    %627 = vmatpush1.msra.mxu0 %v626
    %628 = vmatprep.subr.mxu0 0.0
    %v629 = vsub.f32 %v168, %v168
    %v630 = vand.u32 %v629, 4294901760
    %631 = vmatpush1.msra.mxu0 %v630
    %632 = vmatprep.subr.mxu0 0.0
    %v633 = vsub.f32 %v169, %v169
    %v634 = vand.u32 %v633, 4294901760
    %635 = vmatpush1.msra.mxu0 %v634
    %636 = vmatprep.subr.mxu0 0.0
    %637 = vmatpush1.msra.mxu0 0.0
    %638 = vmatprep.subr.mxu0 0.0
    %639 = vmatpush1.msra.mxu0 0.0
    %640 = vmatprep.subr.mxu0 0.0
    %641 = vmatpush1.msra.mxu0 0.0
    %642 = vmatprep.subr.mxu0 0.0
    %643 = vmatpush1.msra.mxu0 0.0
    %644 = vmatprep.subr.mxu0 0.0
    %645 = vmatpush1.msra.mxu0 0.0
    %646 = vmatprep.subr.mxu0 0.0
    %647 = vmatpush1.msra.mxu0 0.0
    %648 = vmatprep.subr.mxu0 0.0
    %649 = vmatpush1.msra.mxu0 0.0
    %650 = vmatprep.subr.mxu0 0.0
    %651 = vmatpush1.msra.mxu0 0.0
    %652 = vmatprep.subr.mxu0 0.0
    %653 = vmatpush1.msra.mxu0 0.0
    %654 = vmatprep.subr.mxu0 0.0
    %655 = vmatpush1.msra.mxu0 0.0
    %656 = vmatprep.subr.mxu0 0.0
    %657 = vmatpush1.msra.mxu0 0.0
    %658 = vmatprep.subr.mxu0 0.0
    %659 = vmatpush1.msra.mxu0 0.0
    %660 = vmatprep.subr.mxu0 0.0
    %661 = vmatpush1.msra.mxu0 0.0
    %662 = vmatprep.subr.mxu0 0.0
    %663 = vmatpush1.msra.mxu0 0.0
    %664 = vmatprep.subr.mxu0 0.0
    %665 = vmatpush1.msra.mxu0 0.0
    %666 = vmatprep.subr.mxu0 0.0
    %667 = vmatpush1.msra.mxu0 0.0
    %668 = vmatprep.mubr.f32.mxu0 0.0
    %v669 = vand.u32 %v69, 4294901760
    %670 = vmatmul.mubr.f32.gmra.mrb[0].mxu0 %v669
    %v671 = vpop.f32.mrb[0].mxu0
    %v672 = vadd.f32 %v561, %v671
    %v673 = vpop.f32.mrb[0].mxu0
    %674 = vmatprep.mubr.f32.mxu0 0.0
    %v675 = vand.u32 %v70, 4294901760
    %676 = vmatmul.mubr.f32.gmra.mrb[0].mxu0 %v675
    %v677 = vpop.f32.mrb[0].mxu0
    %v678 = vadd.f32 %v569, %v677
    %v679 = vpop.f32.mrb[0].mxu0
    %680 = vdwg.mxu0
    %681 = vmatprep.subr.mxu0 0.0
    %682 = vmatpush1.msra.mxu0 %v154
    %683 = vmatprep.subr.mxu0 0.0
    %684 = vmatpush1.msra.mxu0 %v155
    %685 = vmatprep.subr.mxu0 0.0
    %686 = vmatpush1.msra.mxu0 %v156
    %687 = vmatprep.subr.mxu0 0.0
    %688 = vmatpush1.msra.mxu0 %v157
    %689 = vmatprep.subr.mxu0 0.0
    %690 = vmatpush1.msra.mxu0 %v158
    %691 = vmatprep.subr.mxu0 0.0
    %692 = vmatpush1.msra.mxu0 %v159
    %693 = vmatprep.subr.mxu0 0.0
    %694 = vmatpush1.msra.mxu0 %v160
    %695 = vmatprep.subr.mxu0 0.0
    %696 = vmatpush1.msra.mxu0 %v161
    %697 = vmatprep.subr.mxu0 0.0
    %698 = vmatpush1.msra.mxu0 %v162
    %699 = vmatprep.subr.mxu0 0.0
    %700 = vmatpush1.msra.mxu0 %v163
    %701 = vmatprep.subr.mxu0 0.0
    %702 = vmatpush1.msra.mxu0 %v164
    %703 = vmatprep.subr.mxu0 0.0
    %704 = vmatpush1.msra.mxu0 %v165
    %705 = vmatprep.subr.mxu0 0.0
    %706 = vmatpush1.msra.mxu0 %v166
    %707 = vmatprep.subr.mxu0 0.0
    %708 = vmatpush1.msra.mxu0 %v167
    %709 = vmatprep.subr.mxu0 0.0
    %710 = vmatpush1.msra.mxu0 %v168
    %711 = vmatprep.subr.mxu0 0.0
    %712 = vmatpush1.msra.mxu0 %v169
    %713 = vmatprep.subr.mxu0 0.0
    %714 = vmatpush1.msra.mxu0 0.0
    %715 = vmatprep.subr.mxu0 0.0
    %716 = vmatpush1.msra.mxu0 0.0
    %717 = vmatprep.subr.mxu0 0.0
    %718 = vmatpush1.msra.mxu0 0.0
    %719 = vmatprep.subr.mxu0 0.0
    %720 = vmatpush1.msra.mxu0 0.0
    %721 = vmatprep.subr.mxu0 0.0
    %722 = vmatpush1.msra.mxu0 0.0
    %723 = vmatprep.subr.mxu0 0.0
    %724 = vmatpush1.msra.mxu0 0.0
    %725 = vmatprep.subr.mxu0 0.0
    %726 = vmatpush1.msra.mxu0 0.0
    %727 = vmatprep.subr.mxu0 0.0
    %728 = vmatpush1.msra.mxu0 0.0
    %729 = vmatprep.subr.mxu0 0.0
    %730 = vmatpush1.msra.mxu0 0.0
    %731 = vmatprep.subr.mxu0 0.0
    %732 = vmatpush1.msra.mxu0 0.0
    %733 = vmatprep.subr.mxu0 0.0
    %734 = vmatpush1.msra.mxu0 0.0
    %735 = vmatprep.subr.mxu0 0.0
    %736 = vmatpush1.msra.mxu0 0.0
    %737 = vmatprep.subr.mxu0 0.0
    %738 = vmatpush1.msra.mxu0 0.0
    %739 = vmatprep.subr.mxu0 0.0
    %740 = vmatpush1.msra.mxu0 0.0
    %741 = vmatprep.subr.mxu0 0.0
    %742 = vmatpush1.msra.mxu0 0.0
    %743 = vmatprep.subr.mxu0 0.0
    %744 = vmatpush1.msra.mxu0 0.0
    %745 = vmatprep.mubr.f32.mxu0 0.0
    %v746 = vand.u32 %v69, 4294901760
    %747 = vmatmul.mubr.f32.gmra.mrb[0].mxu0 %v746
    %v748 = vpop.f32.mrb[0].mxu0
    %v749 = vadd.f32 %v672, %v748
    %v750 = vpop.f32.mrb[0].mxu0
    %751 = vmatprep.mubr.f32.mxu0 0.0
    %v752 = vand.u32 %v70, 4294901760
    %753 = vmatmul.mubr.f32.gmra.mrb[0].mxu0 %v752
    %v754 = vpop.f32.mrb[0].mxu0
    %v755 = vadd.f32 %v678, %v754
    %v756 = vpop.f32.mrb[0].mxu0
    %757 = vdwg.mxu0
    %758 = vmatprep.subr.mxu0 0.0
    %759 = vmatpush1.msra.mxu0 %v154
    %760 = vmatprep.subr.mxu0 0.0
    %761 = vmatpush1.msra.mxu0 %v155
    %762 = vmatprep.subr.mxu0 0.0
    %763 = vmatpush1.msra.mxu0 %v156
    %764 = vmatprep.subr.mxu0 0.0
    %765 = vmatpush1.msra.mxu0 %v157
    %766 = vmatprep.subr.mxu0 0.0
    %767 = vmatpush1.msra.mxu0 %v158
    %768 = vmatprep.subr.mxu0 0.0
    %769 = vmatpush1.msra.mxu0 %v159
    %770 = vmatprep.subr.mxu0 0.0
    %771 = vmatpush1.msra.mxu0 %v160
    %772 = vmatprep.subr.mxu0 0.0
    %773 = vmatpush1.msra.mxu0 %v161
    %774 = vmatprep.subr.mxu0 0.0
    %775 = vmatpush1.msra.mxu0 %v162
    %776 = vmatprep.subr.mxu0 0.0
    %777 = vmatpush1.msra.mxu0 %v163
    %778 = vmatprep.subr.mxu0 0.0
    %779 = vmatpush1.msra.mxu0 %v164
    %780 = vmatprep.subr.mxu0 0.0
    %781 = vmatpush1.msra.mxu0 %v165
    %782 = vmatprep.subr.mxu0 0.0
    %783 = vmatpush1.msra.mxu0 %v166
    %784 = vmatprep.subr.mxu0 0.0
    %785 = vmatpush1.msra.mxu0 %v167
    %786 = vmatprep.subr.mxu0 0.0
    %787 = vmatpush1.msra.mxu0 %v168
    %788 = vmatprep.subr.mxu0 0.0
    %789 = vmatpush1.msra.mxu0 %v169
    %790 = vmatprep.subr.mxu0 0.0
    %791 = vmatpush1.msra.mxu0 0.0
    %792 = vmatprep.subr.mxu0 0.0
    %793 = vmatpush1.msra.mxu0 0.0
    %794 = vmatprep.subr.mxu0 0.0
    %795 = vmatpush1.msra.mxu0 0.0
    %796 = vmatprep.subr.mxu0 0.0
    %797 = vmatpush1.msra.mxu0 0.0
    %798 = vmatprep.subr.mxu0 0.0
    %799 = vmatpush1.msra.mxu0 0.0
    %800 = vmatprep.subr.mxu0 0.0
    %801 = vmatpush1.msra.mxu0 0.0
    %802 = vmatprep.subr.mxu0 0.0
    %803 = vmatpush1.msra.mxu0 0.0
    %804 = vmatprep.subr.mxu0 0.0
    %805 = vmatpush1.msra.mxu0 0.0
    %806 = vmatprep.subr.mxu0 0.0
    %807 = vmatpush1.msra.mxu0 0.0
    %808 = vmatprep.subr.mxu0 0.0
    %809 = vmatpush1.msra.mxu0 0.0
    %810 = vmatprep.subr.mxu0 0.0
    %811 = vmatpush1.msra.mxu0 0.0
    %812 = vmatprep.subr.mxu0 0.0
    %813 = vmatpush1.msra.mxu0 0.0
    %814 = vmatprep.subr.mxu0 0.0
    %815 = vmatpush1.msra.mxu0 0.0
    %816 = vmatprep.subr.mxu0 0.0
    %817 = vmatpush1.msra.mxu0 0.0
    %818 = vmatprep.subr.mxu0 0.0
    %819 = vmatpush1.msra.mxu0 0.0
    %820 = vmatprep.subr.mxu0 0.0
    %821 = vmatpush1.msra.mxu0 0.0
    %822 = vmatprep.mubr.f32.mxu0 0.0
    %v823 = vand.u32 %v83, 4294901760
    %v824 = vsub.f32 %v83, %v823
    %v825 = vand.u32 %v824, 4294901760
    %v826 = vsub.f32 %v824, %v825
    %v827 = vand.u32 %v826, 4294901760
    %828 = vmatmul.mubr.f32.gmra.mrb[0].mxu0 %v827
    %v829 = vpop.f32.mrb[0].mxu0
    %v830 = vadd.f32 0.0, %v829
    %v831 = vpop.f32.mrb[0].mxu0
    %832 = vmatprep.mubr.f32.mxu0 0.0
    %v833 = vand.u32 %v84, 4294901760
    %v834 = vsub.f32 %v84, %v833
    %v835 = vand.u32 %v834, 4294901760
    %v836 = vsub.f32 %v834, %v835
    %v837 = vand.u32 %v836, 4294901760
    %838 = vmatmul.mubr.f32.gmra.mrb[0].mxu0 %v837
    %v839 = vpop.f32.mrb[0].mxu0
    %v840 = vadd.f32 0.0, %v839
    %v841 = vpop.f32.mrb[0].mxu0
    %842 = vdwg.mxu0
    %843 = vmatprep.subr.mxu0 0.0
    %v844 = vsub.f32 %v154, %v154
    %v845 = vand.u32 %v844, 4294901760
    %v846 = vsub.f32 %v844, %v845
    %v847 = vand.u32 %v846, 4294901760
    %848 = vmatpush1.msra.mxu0 %v847
    %849 = vmatprep.subr.mxu0 0.0
    %v850 = vsub.f32 %v155, %v155
    %v851 = vand.u32 %v850, 4294901760
    %v852 = vsub.f32 %v850, %v851
    %v853 = vand.u32 %v852, 4294901760
    %854 = vmatpush1.msra.mxu0 %v853
    %855 = vmatprep.subr.mxu0 0.0
    %v856 = vsub.f32 %v156, %v156
    %v857 = vand.u32 %v856, 4294901760
    %v858 = vsub.f32 %v856, %v857
    %v859 = vand.u32 %v858, 4294901760
    %860 = vmatpush1.msra.mxu0 %v859
    %861 = vmatprep.subr.mxu0 0.0
    %v862 = vsub.f32 %v157, %v157
    %v863 = vand.u32 %v862, 4294901760
    %v864 = vsub.f32 %v862, %v863
    %v865 = vand.u32 %v864, 4294901760
    %866 = vmatpush1.msra.mxu0 %v865
    %867 = vmatprep.subr.mxu0 0.0
    %v868 = vsub.f32 %v158, %v158
    %v869 = vand.u32 %v868, 4294901760
    %v870 = vsub.f32 %v868, %v869
    %v871 = vand.u32 %v870, 4294901760
    %872 = vmatpush1.msra.mxu0 %v871
    %873 = vmatprep.subr.mxu0 0.0
    %v874 = vsub.f32 %v159, %v159
    %v875 = vand.u32 %v874, 4294901760
    %v876 = vsub.f32 %v874, %v875
    %v877 = vand.u32 %v876, 4294901760
    %878 = vmatpush1.msra.mxu0 %v877
    %879 = vmatprep.subr.mxu0 0.0
    %v880 = vsub.f32 %v160, %v160
    %v881 = vand.u32 %v880, 4294901760
    %v882 = vsub.f32 %v880, %v881
    %v883 = vand.u32 %v882, 4294901760
    %884 = vmatpush1.msra.mxu0 %v883
    %885 = vmatprep.subr.mxu0 0.0
    %v886 = vsub.f32 %v161, %v161
    %v887 = vand.u32 %v886, 4294901760
    %v888 = vsub.f32 %v886, %v887
    %v889 = vand.u32 %v888, 4294901760
    %890 = vmatpush1.msra.mxu0 %v889
    %891 = vmatprep.subr.mxu0 0.0
    %v892 = vsub.f32 %v162, %v162
    %v893 = vand.u32 %v892, 4294901760
    %v894 = vsub.f32 %v892, %v893
    %v895 = vand.u32 %v894, 4294901760
    %896 = vmatpush1.msra.mxu0 %v895
    %897 = vmatprep.subr.mxu0 0.0
    %v898 = vsub.f32 %v163, %v163
    %v899 = vand.u32 %v898, 4294901760
    %v900 = vsub.f32 %v898, %v899
    %v901 = vand.u32 %v900, 4294901760
    %902 = vmatpush1.msra.mxu0 %v901
    %903 = vmatprep.subr.mxu0 0.0
    %v904 = vsub.f32 %v164, %v164
    %v905 = vand.u32 %v904, 4294901760
    %v906 = vsub.f32 %v904, %v905
    %v907 = vand.u32 %v906, 4294901760
    %908 = vmatpush1.msra.mxu0 %v907
    %909 = vmatprep.subr.mxu0 0.0
    %v910 = vsub.f32 %v165, %v165
    %v911 = vand.u32 %v910, 4294901760
    %v912 = vsub.f32 %v910, %v911
    %v913 = vand.u32 %v912, 4294901760
    %914 = vmatpush1.msra.mxu0 %v913
    %915 = vmatprep.subr.mxu0 0.0
    %v916 = vsub.f32 %v166, %v166
    %v917 = vand.u32 %v916, 4294901760
    %v918 = vsub.f32 %v916, %v917
    %v919 = vand.u32 %v918, 4294901760
    %920 = vmatpush1.msra.mxu0 %v919
    %921 = vmatprep.subr.mxu0 0.0
    %v922 = vsub.f32 %v167, %v167
    %v923 = vand.u32 %v922, 4294901760
    %v924 = vsub.f32 %v922, %v923
    %v925 = vand.u32 %v924, 4294901760
    %926 = vmatpush1.msra.mxu0 %v925
    %927 = vmatprep.subr.mxu0 0.0
    %v928 = vsub.f32 %v168, %v168
    %v929 = vand.u32 %v928, 4294901760
    %v930 = vsub.f32 %v928, %v929
    %v931 = vand.u32 %v930, 4294901760
    %932 = vmatpush1.msra.mxu0 %v931
    %933 = vmatprep.subr.mxu0 0.0
    %v934 = vsub.f32 %v169, %v169
    %v935 = vand.u32 %v934, 4294901760
    %v936 = vsub.f32 %v934, %v935
    %v937 = vand.u32 %v936, 4294901760
    %938 = vmatpush1.msra.mxu0 %v937
    %939 = vmatprep.subr.mxu0 0.0
    %940 = vmatpush1.msra.mxu0 0.0
    %941 = vmatprep.subr.mxu0 0.0
    %942 = vmatpush1.msra.mxu0 0.0
    %943 = vmatprep.subr.mxu0 0.0
    %944 = vmatpush1.msra.mxu0 0.0
    %945 = vmatprep.subr.mxu0 0.0
    %946 = vmatpush1.msra.mxu0 0.0
    %947 = vmatprep.subr.mxu0 0.0
    %948 = vmatpush1.msra.mxu0 0.0
    %949 = vmatprep.subr.mxu0 0.0
    %950 = vmatpush1.msra.mxu0 0.0
    %951 = vmatprep.subr.mxu0 0.0
    %952 = vmatpush1.msra.mxu0 0.0
    %953 = vmatprep.subr.mxu0 0.0
    %954 = vmatpush1.msra.mxu0 0.0
    %955 = vmatprep.subr.mxu0 0.0
    %956 = vmatpush1.msra.mxu0 0.0
    %957 = vmatprep.subr.mxu0 0.0
    %958 = vmatpush1.msra.mxu0 0.0
    %959 = vmatprep.subr.mxu0 0.0
    %960 = vmatpush1.msra.mxu0 0.0
    %961 = vmatprep.subr.mxu0 0.0
    %962 = vmatpush1.msra.mxu0 0.0
    %963 = vmatprep.subr.mxu0 0.0
    %964 = vmatpush1.msra.mxu0 0.0
    %965 = vmatprep.subr.mxu0 0.0
    %966 = vmatpush1.msra.mxu0 0.0
    %967 = vmatprep.subr.mxu0 0.0
    %968 = vmatpush1.msra.mxu0 0.0
    %969 = vmatprep.subr.mxu0 0.0
    %970 = vmatpush1.msra.mxu0 0.0
    %971 = vmatprep.mubr.f32.mxu0 0.0
    %v972 = vand.u32 %v83, 4294901760
    %973 = vmatmul.mubr.f32.gmra.mrb[0].mxu0 %v972
    %v974 = vpop.f32.mrb[0].mxu0
    %v975 = vadd.f32 %v830, %v974
    %v976 = vpop.f32.mrb[0].mxu0
    %977 = vmatprep.mubr.f32.mxu0 0.0
    %v978 = vand.u32 %v84, 4294901760
    %979 = vmatmul.mubr.f32.gmra.mrb[0].mxu0 %v978
    %v980 = vpop.f32.mrb[0].mxu0
    %v981 = vadd.f32 %v840, %v980
    %v982 = vpop.f32.mrb[0].mxu0
    %983 = vdwg.mxu0
    %984 = vmatprep.subr.mxu0 0.0
    %v985 = vsub.f32 %v154, %v154
    %986 = vmatpush1.msra.mxu0 %v985
    %987 = vmatprep.subr.mxu0 0.0
    %v988 = vsub.f32 %v155, %v155
    %989 = vmatpush1.msra.mxu0 %v988
    %990 = vmatprep.subr.mxu0 0.0
    %v991 = vsub.f32 %v156, %v156
    %992 = vmatpush1.msra.mxu0 %v991
    %993 = vmatprep.subr.mxu0 0.0
    %v994 = vsub.f32 %v157, %v157
    %995 = vmatpush1.msra.mxu0 %v994
    %996 = vmatprep.subr.mxu0 0.0
    %v997 = vsub.f32 %v158, %v158
    %998 = vmatpush1.msra.mxu0 %v997
    %999 = vmatprep.subr.mxu0 0.0
    %v1000 = vsub.f32 %v159, %v159
    %1001 = vmatpush1.msra.mxu0 %v1000
    %1002 = vmatprep.subr.mxu0 0.0
    %v1003 = vsub.f32 %v160, %v160
    %1004 = vmatpush1.msra.mxu0 %v1003
    %1005 = vmatprep.subr.mxu0 0.0
    %v1006 = vsub.f32 %v161, %v161
    %1007 = vmatpush1.msra.mxu0 %v1006
    %1008 = vmatprep.subr.mxu0 0.0
    %v1009 = vsub.f32 %v162, %v162
    %1010 = vmatpush1.msra.mxu0 %v1009
    %1011 = vmatprep.subr.mxu0 0.0
    %v1012 = vsub.f32 %v163, %v163
    %1013 = vmatpush1.msra.mxu0 %v1012
    %1014 = vmatprep.subr.mxu0 0.0
    %v1015 = vsub.f32 %v164, %v164
    %1016 = vmatpush1.msra.mxu0 %v1015
    %1017 = vmatprep.subr.mxu0 0.0
    %v1018 = vsub.f32 %v165, %v165
    %1019 = vmatpush1.msra.mxu0 %v1018
    %1020 = vmatprep.subr.mxu0 0.0
    %v1021 = vsub.f32 %v166, %v166
    %1022 = vmatpush1.msra.mxu0 %v1021
    %1023 = vmatprep.subr.mxu0 0.0
    %v1024 = vsub.f32 %v167, %v167
    %1025 = vmatpush1.msra.mxu0 %v1024
    %1026 = vmatprep.subr.mxu0 0.0
    %v1027 = vsub.f32 %v168, %v168
    %1028 = vmatpush1.msra.mxu0 %v1027
    %1029 = vmatprep.subr.mxu0 0.0
    %v1030 = vsub.f32 %v169, %v169
    %1031 = vmatpush1.msra.mxu0 %v1030
    %1032 = vmatprep.subr.mxu0 0.0
    %1033 = vmatpush1.msra.mxu0 0.0
    %1034 = vmatprep.subr.mxu0 0.0
    %1035 = vmatpush1.msra.mxu0 0.0
    %1036 = vmatprep.subr.mxu0 0.0
    %1037 = vmatpush1.msra.mxu0 0.0
    %1038 = vmatprep.subr.mxu0 0.0
    %1039 = vmatpush1.msra.mxu0 0.0
    %1040 = vmatprep.subr.mxu0 0.0
    %1041 = vmatpush1.msra.mxu0 0.0
    %1042 = vmatprep.subr.mxu0 0.0
    %1043 = vmatpush1.msra.mxu0 0.0
    %1044 = vmatprep.subr.mxu0 0.0
    %1045 = vmatpush1.msra.mxu0 0.0
    %1046 = vmatprep.subr.mxu0 0.0
    %1047 = vmatpush1.msra.mxu0 0.0
    %1048 = vmatprep.subr.mxu0 0.0
    %1049 = vmatpush1.msra.mxu0 0.0
    %1050 = vmatprep.subr.mxu0 0.0
    %1051 = vmatpush1.msra.mxu0 0.0
    %1052 = vmatprep.subr.mxu0 0.0
    %1053 = vmatpush1.msra.mxu0 0.0
    %1054 = vmatprep.subr.mxu0 0.0
    %1055 = vmatpush1.msra.mxu0 0.0
    %1056 = vmatprep.subr.mxu0 0.0
    %1057 = vmatpush1.msra.mxu0 0.0
    %1058 = vmatprep.subr.mxu0 0.0
    %1059 = vmatpush1.msra.mxu0 0.0
    %1060 = vmatprep.subr.mxu0 0.0
    %1061 = vmatpush1.msra.mxu0 0.0
    %1062 = vmatprep.subr.mxu0 0.0
    %1063 = vmatpush1.msra.mxu0 0.0
    %1064 = vmatprep.mubr.f32.mxu0 0.0
    %v1065 = vand.u32 %v83, 4294901760
    %v1066 = vsub.f32 %v83, %v1065
    %1067 = vmatmul.mubr.f32.gmra.mrb[0].mxu0 %v1066
    %v1068 = vpop.f32.mrb[0].mxu0
    %v1069 = vadd.f32 %v975, %v1068
    %v1070 = vpop.f32.mrb[0].mxu0
    %1071 = vmatprep.mubr.f32.mxu0 0.0
    %v1072 = vand.u32 %v84, 4294901760
    %v1073 = vsub.f32 %v84, %v1072
    %1074 = vmatmul.mubr.f32.gmra.mrb[0].mxu0 %v1073
    %v1075 = vpop.f32.mrb[0].mxu0
    %v1076 = vadd.f32 %v981, %v1075
    %v1077 = vpop.f32.mrb[0].mxu0
    %1078 = vdwg.mxu0
    %1079 = vmatprep.subr.mxu0 0.0
    %1080 = vmatpush1.msra.mxu0 %v154
    %1081 = vmatprep.subr.mxu0 0.0
    %1082 = vmatpush1.msra.mxu0 %v155
    %1083 = vmatprep.subr.mxu0 0.0
    %1084 = vmatpush1.msra.mxu0 %v156
    %1085 = vmatprep.subr.mxu0 0.0
    %1086 = vmatpush1.msra.mxu0 %v157
    %1087 = vmatprep.subr.mxu0 0.0
    %1088 = vmatpush1.msra.mxu0 %v158
    %1089 = vmatprep.subr.mxu0 0.0
    %1090 = vmatpush1.msra.mxu0 %v159
    %1091 = vmatprep.subr.mxu0 0.0
    %1092 = vmatpush1.msra.mxu0 %v160
    %1093 = vmatprep.subr.mxu0 0.0
    %1094 = vmatpush1.msra.mxu0 %v161
    %1095 = vmatprep.subr.mxu0 0.0
    %1096 = vmatpush1.msra.mxu0 %v162
    %1097 = vmatprep.subr.mxu0 0.0
    %1098 = vmatpush1.msra.mxu0 %v163
    %1099 = vmatprep.subr.mxu0 0.0
    %1100 = vmatpush1.msra.mxu0 %v164
    %1101 = vmatprep.subr.mxu0 0.0
    %1102 = vmatpush1.msra.mxu0 %v165
    %1103 = vmatprep.subr.mxu0 0.0
    %1104 = vmatpush1.msra.mxu0 %v166
    %1105 = vmatprep.subr.mxu0 0.0
    %1106 = vmatpush1.msra.mxu0 %v167
    %1107 = vmatprep.subr.mxu0 0.0
    %1108 = vmatpush1.msra.mxu0 %v168
    %1109 = vmatprep.subr.mxu0 0.0
    %1110 = vmatpush1.msra.mxu0 %v169
    %1111 = vmatprep.subr.mxu0 0.0
    %1112 = vmatpush1.msra.mxu0 0.0
    %1113 = vmatprep.subr.mxu0 0.0
    %1114 = vmatpush1.msra.mxu0 0.0
    %1115 = vmatprep.subr.mxu0 0.0
    %1116 = vmatpush1.msra.mxu0 0.0
    %1117 = vmatprep.subr.mxu0 0.0
    %1118 = vmatpush1.msra.mxu0 0.0
    %1119 = vmatprep.subr.mxu0 0.0
    %1120 = vmatpush1.msra.mxu0 0.0
    %1121 = vmatprep.subr.mxu0 0.0
    %1122 = vmatpush1.msra.mxu0 0.0
    %1123 = vmatprep.subr.mxu0 0.0
    %1124 = vmatpush1.msra.mxu0 0.0
    %1125 = vmatprep.subr.mxu0 0.0
    %1126 = vmatpush1.msra.mxu0 0.0
    %1127 = vmatprep.subr.mxu0 0.0
    %1128 = vmatpush1.msra.mxu0 0.0
    %1129 = vmatprep.subr.mxu0 0.0
    %1130 = vmatpush1.msra.mxu0 0.0
    %1131 = vmatprep.subr.mxu0 0.0
    %1132 = vmatpush1.msra.mxu0 0.0
    %1133 = vmatprep.subr.mxu0 0.0
    %1134 = vmatpush1.msra.mxu0 0.0
    %1135 = vmatprep.subr.mxu0 0.0
    %1136 = vmatpush1.msra.mxu0 0.0
    %1137 = vmatprep.subr.mxu0 0.0
    %1138 = vmatpush1.msra.mxu0 0.0
    %1139 = vmatprep.subr.mxu0 0.0
    %1140 = vmatpush1.msra.mxu0 0.0
    %1141 = vmatprep.subr.mxu0 0.0
    %1142 = vmatpush1.msra.mxu0 0.0
    %1143 = vmatprep.mubr.f32.mxu0 0.0
    %v1144 = vand.u32 %v83, 4294901760
    %v1145 = vsub.f32 %v83, %v1144
    %v1146 = vand.u32 %v1145, 4294901760
    %1147 = vmatmul.mubr.f32.gmra.mrb[0].mxu0 %v1146
    %v1148 = vpop.f32.mrb[0].mxu0
    %v1149 = vadd.f32 %v1069, %v1148
    %v1150 = vpop.f32.mrb[0].mxu0
    %1151 = vmatprep.mubr.f32.mxu0 0.0
    %v1152 = vand.u32 %v84, 4294901760
    %v1153 = vsub.f32 %v84, %v1152
    %v1154 = vand.u32 %v1153, 4294901760
    %1155 = vmatmul.mubr.f32.gmra.mrb[0].mxu0 %v1154
    %v1156 = vpop.f32.mrb[0].mxu0
    %v1157 = vadd.f32 %v1076, %v1156
    %v1158 = vpop.f32.mrb[0].mxu0
    %1159 = vdwg.mxu0
    %1160 = vmatprep.subr.mxu0 0.0
    %v1161 = vsub.f32 %v154, %v154
    %v1162 = vand.u32 %v1161, 4294901760
    %1163 = vmatpush1.msra.mxu0 %v1162
    %1164 = vmatprep.subr.mxu0 0.0
    %v1165 = vsub.f32 %v155, %v155
    %v1166 = vand.u32 %v1165, 4294901760
    %1167 = vmatpush1.msra.mxu0 %v1166
    %1168 = vmatprep.subr.mxu0 0.0
    %v1169 = vsub.f32 %v156, %v156
    %v1170 = vand.u32 %v1169, 4294901760
    %1171 = vmatpush1.msra.mxu0 %v1170
    %1172 = vmatprep.subr.mxu0 0.0
    %v1173 = vsub.f32 %v157, %v157
    %v1174 = vand.u32 %v1173, 4294901760
    %1175 = vmatpush1.msra.mxu0 %v1174
    %1176 = vmatprep.subr.mxu0 0.0
    %v1177 = vsub.f32 %v158, %v158
    %v1178 = vand.u32 %v1177, 4294901760
    %1179 = vmatpush1.msra.mxu0 %v1178
    %1180 = vmatprep.subr.mxu0 0.0
    %v1181 = vsub.f32 %v159, %v159
    %v1182 = vand.u32 %v1181, 4294901760
    %1183 = vmatpush1.msra.mxu0 %v1182
    %1184 = vmatprep.subr.mxu0 0.0
    %v1185 = vsub.f32 %v160, %v160
    %v1186 = vand.u32 %v1185, 4294901760
    %1187 = vmatpush1.msra.mxu0 %v1186
    %1188 = vmatprep.subr.mxu0 0.0
    %v1189 = vsub.f32 %v161, %v161
    %v1190 = vand.u32 %v1189, 4294901760
    %1191 = vmatpush1.msra.mxu0 %v1190
    %1192 = vmatprep.subr.mxu0 0.0
    %v1193 = vsub.f32 %v162, %v162
    %v1194 = vand.u32 %v1193, 4294901760
    %1195 = vmatpush1.msra.mxu0 %v1194
    %1196 = vmatprep.subr.mxu0 0.0
    %v1197 = vsub.f32 %v163, %v163
    %v1198 = vand.u32 %v1197, 4294901760
    %1199 = vmatpush1.msra.mxu0 %v1198
    %1200 = vmatprep.subr.mxu0 0.0
    %v1201 = vsub.f32 %v164, %v164
    %v1202 = vand.u32 %v1201, 4294901760
    %1203 = vmatpush1.msra.mxu0 %v1202
    %1204 = vmatprep.subr.mxu0 0.0
    %v1205 = vsub.f32 %v165, %v165
    %v1206 = vand.u32 %v1205, 4294901760
    %1207 = vmatpush1.msra.mxu0 %v1206
    %1208 = vmatprep.subr.mxu0 0.0
    %v1209 = vsub.f32 %v166, %v166
    %v1210 = vand.u32 %v1209, 4294901760
    %1211 = vmatpush1.msra.mxu0 %v1210
    %1212 = vmatprep.subr.mxu0 0.0
    %v1213 = vsub.f32 %v167, %v167
    %v1214 = vand.u32 %v1213, 4294901760
    %1215 = vmatpush1.msra.mxu0 %v1214
    %1216 = vmatprep.subr.mxu0 0.0
    %v1217 = vsub.f32 %v168, %v168
    %v1218 = vand.u32 %v1217, 4294901760
    %1219 = vmatpush1.msra.mxu0 %v1218
    %1220 = vmatprep.subr.mxu0 0.0
    %v1221 = vsub.f32 %v169, %v169
    %v1222 = vand.u32 %v1221, 4294901760
    %1223 = vmatpush1.msra.mxu0 %v1222
    %1224 = vmatprep.subr.mxu0 0.0
    %1225 = vmatpush1.msra.mxu0 0.0
    %1226 = vmatprep.subr.mxu0 0.0
    %1227 = vmatpush1.msra.mxu0 0.0
    %1228 = vmatprep.subr.mxu0 0.0
    %1229 = vmatpush1.msra.mxu0 0.0
    %1230 = vmatprep.subr.mxu0 0.0
    %1231 = vmatpush1.msra.mxu0 0.0
    %1232 = vmatprep.subr.mxu0 0.0
    %1233 = vmatpush1.msra.mxu0 0.0
    %1234 = vmatprep.subr.mxu0 0.0
    %1235 = vmatpush1.msra.mxu0 0.0
    %1236 = vmatprep.subr.mxu0 0.0
    %1237 = vmatpush1.msra.mxu0 0.0
    %1238 = vmatprep.subr.mxu0 0.0
    %1239 = vmatpush1.msra.mxu0 0.0
    %1240 = vmatprep.subr.mxu0 0.0
    %1241 = vmatpush1.msra.mxu0 0.0
    %1242 = vmatprep.subr.mxu0 0.0
    %1243 = vmatpush1.msra.mxu0 0.0
    %1244 = vmatprep.subr.mxu0 0.0
    %1245 = vmatpush1.msra.mxu0 0.0
    %1246 = vmatprep.subr.mxu0 0.0
    %1247 = vmatpush1.msra.mxu0 0.0
    %1248 = vmatprep.subr.mxu0 0.0
    %1249 = vmatpush1.msra.mxu0 0.0
    %1250 = vmatprep.subr.mxu0 0.0
    %1251 = vmatpush1.msra.mxu0 0.0
    %1252 = vmatprep.subr.mxu0 0.0
    %1253 = vmatpush1.msra.mxu0 0.0
    %1254 = vmatprep.subr.mxu0 0.0
    %1255 = vmatpush1.msra.mxu0 0.0
    %1256 = vmatprep.mubr.f32.mxu0 0.0
    %v1257 = vand.u32 %v83, 4294901760
    %1258 = vmatmul.mubr.f32.gmra.mrb[0].mxu0 %v1257
    %v1259 = vpop.f32.mrb[0].mxu0
    %v1260 = vadd.f32 %v1149, %v1259
    %v1261 = vpop.f32.mrb[0].mxu0
    %1262 = vmatprep.mubr.f32.mxu0 0.0
    %v1263 = vand.u32 %v84, 4294901760
    %1264 = vmatmul.mubr.f32.gmra.mrb[0].mxu0 %v1263
    %v1265 = vpop.f32.mrb[0].mxu0
    %v1266 = vadd.f32 %v1157, %v1265
    %v1267 = vpop.f32.mrb[0].mxu0
    %1268 = vdwg.mxu0
    %1269 = vmatprep.subr.mxu0 0.0
    %1270 = vmatpush1.msra.mxu0 %v154
    %1271 = vmatprep.subr.mxu0 0.0
    %1272 = vmatpush1.msra.mxu0 %v155
    %1273 = vmatprep.subr.mxu0 0.0
    %1274 = vmatpush1.msra.mxu0 %v156
    %1275 = vmatprep.subr.mxu0 0.0
    %1276 = vmatpush1.msra.mxu0 %v157
    %1277 = vmatprep.subr.mxu0 0.0
    %1278 = vmatpush1.msra.mxu0 %v158
    %1279 = vmatprep.subr.mxu0 0.0
    %1280 = vmatpush1.msra.mxu0 %v159
    %1281 = vmatprep.subr.mxu0 0.0
    %1282 = vmatpush1.msra.mxu0 %v160
    %1283 = vmatprep.subr.mxu0 0.0
    %1284 = vmatpush1.msra.mxu0 %v161
    %1285 = vmatprep.subr.mxu0 0.0
    %1286 = vmatpush1.msra.mxu0 %v162
    %1287 = vmatprep.subr.mxu0 0.0
    %1288 = vmatpush1.msra.mxu0 %v163
    %1289 = vmatprep.subr.mxu0 0.0
    %1290 = vmatpush1.msra.mxu0 %v164
    %1291 = vmatprep.subr.mxu0 0.0
    %1292 = vmatpush1.msra.mxu0 %v165
    %1293 = vmatprep.subr.mxu0 0.0
    %1294 = vmatpush1.msra.mxu0 %v166
    %1295 = vmatprep.subr.mxu0 0.0
    %1296 = vmatpush1.msra.mxu0 %v167
    %1297 = vmatprep.subr.mxu0 0.0
    %1298 = vmatpush1.msra.mxu0 %v168
    %1299 = vmatprep.subr.mxu0 0.0
    %1300 = vmatpush1.msra.mxu0 %v169
    %1301 = vmatprep.subr.mxu0 0.0
    %1302 = vmatpush1.msra.mxu0 0.0
    %1303 = vmatprep.subr.mxu0 0.0
    %1304 = vmatpush1.msra.mxu0 0.0
    %1305 = vmatprep.subr.mxu0 0.0
    %1306 = vmatpush1.msra.mxu0 0.0
    %1307 = vmatprep.subr.mxu0 0.0
    %1308 = vmatpush1.msra.mxu0 0.0
    %1309 = vmatprep.subr.mxu0 0.0
    %1310 = vmatpush1.msra.mxu0 0.0
    %1311 = vmatprep.subr.mxu0 0.0
    %1312 = vmatpush1.msra.mxu0 0.0
    %1313 = vmatprep.subr.mxu0 0.0
    %1314 = vmatpush1.msra.mxu0 0.0
    %1315 = vmatprep.subr.mxu0 0.0
    %1316 = vmatpush1.msra.mxu0 0.0
    %1317 = vmatprep.subr.mxu0 0.0
    %1318 = vmatpush1.msra.mxu0 0.0
    %1319 = vmatprep.subr.mxu0 0.0
    %1320 = vmatpush1.msra.mxu0 0.0
    %1321 = vmatprep.subr.mxu0 0.0
    %1322 = vmatpush1.msra.mxu0 0.0
    %1323 = vmatprep.subr.mxu0 0.0
    %1324 = vmatpush1.msra.mxu0 0.0
    %1325 = vmatprep.subr.mxu0 0.0
    %1326 = vmatpush1.msra.mxu0 0.0
    %1327 = vmatprep.subr.mxu0 0.0
    %1328 = vmatpush1.msra.mxu0 0.0
    %1329 = vmatprep.subr.mxu0 0.0
    %1330 = vmatpush1.msra.mxu0 0.0
    %1331 = vmatprep.subr.mxu0 0.0
    %1332 = vmatpush1.msra.mxu0 0.0
    %1333 = vmatprep.mubr.f32.mxu0 0.0
    %v1334 = vand.u32 %v83, 4294901760
    %1335 = vmatmul.mubr.f32.gmra.mrb[0].mxu0 %v1334
    %v1336 = vpop.f32.mrb[0].mxu0
    %v1337 = vadd.f32 %v1260, %v1336
    %v1338 = vpop.f32.mrb[0].mxu0
    %1339 = vmatprep.mubr.f32.mxu0 0.0
    %v1340 = vand.u32 %v84, 4294901760
    %1341 = vmatmul.mubr.f32.gmra.mrb[0].mxu0 %v1340
    %v1342 = vpop.f32.mrb[0].mxu0
    %v1343 = vadd.f32 %v1266, %v1342
    %v1344 = vpop.f32.mrb[0].mxu0
    %1345 = vdwg.mxu0
    %vm1346 = vcmask 31744
    %1347 = vst.msk [vmem:[%s3] sm:$0xff] %vm1346, %v749
    %1348 = vst.msk [vmem:[%s3 + $0x8] sm:$0xff] %vm1346, %v755
    %1351 = vrot.lane.b32.xlu0 %v1337, 4
    %v1352 = vpop.permute.xlu0 %1351
    %1353 = vrot.lane.b32.xlu0 %v1343, 4
    %v1354 = vpop.permute.xlu0 %1353
    %vm1357 = vcmask 64544
    %1358 = vst.msk [vmem:[%s3] sm:$0xff] %vm1357, %v1352
    %1359 = vst.msk [vmem:[%s3 + $0x8] sm:$0xff] %vm1357, %v1354
    // Predicated region
    $region26: #{tpu_custom_call.1} parent=1 // pred_check
      _
    $region27: #{tpu_custom_call.1} parent=1 // pred_check_branch
      %1361 = sbr.rel (0) target = $region29
    $region28: #{tpu_custom_call.1} parent=1 // pred_region
      _
    $region29: #{tpu_custom_call.1} parent=1 // pred_fallthru
      _
    // Predicated region
    $region30: #{tpu_custom_call.1} parent=1 // pred_check
      _
    $region31: #{tpu_custom_call.1} parent=1 // pred_check_branch
      %1363 = sbr.rel (0) target = $region33
    $region32: #{tpu_custom_call.1} parent=1 // pred_region
      _
    $region33: #{tpu_custom_call.1} parent=1 // pred_fallthru
      _
    %1364 = vsyncpa [#allocation3], 1
    %1365 = vsyncpa [#allocation5], 1

</llo_original>
